<compile_context>
chip_gen: v6e
topology: v6e:2x2x1
jax: 0.10.0
libtpu: 0.0.40
codegen_flags: <defaults>
</compile_context>

<pallas_src>
import functools

import jax
import jax.numpy as jnp
from jax import lax
from jax.experimental import pallas as pl
from jax.experimental.pallas import tpu as pltpu

_EPS = 1e-8           # nn.CosineSimilarity default eps
_EPS2 = _EPS * _EPS   # sqrt(max(n2x*n2y, eps^2)) == max(||x||*||y||, eps)


def _ceil_to(x, m):
    return -(-x // m) * m


def _similarity_kl_kernel(v_ref, a_ref, t_ref, o_ref, *, batch, tile_b):
    # Tail-row mask: grid = cdiv(B, tile_b), so rows >= batch in the last
    # block are uninitialized VMEM and must be zeroed before the row-sum.
    row = (lax.broadcasted_iota(jnp.int32, (tile_b, 1), 0)
           + pl.program_id(0) * tile_b)
    valid = row < batch

    v = v_ref[...]
    a = a_ref[...]
    t = t_ref[...]

    def sqnorm(x):
        xf = x.astype(jnp.float32)
        return jnp.sum(xf * xf, axis=-1, keepdims=True)

    # Squared-norm reductions hoisted: one per tensor, reused for all pairs.
    nv2 = sqnorm(v)
    na2 = sqnorm(a)
    nt2 = sqnorm(t)

    def cos_partial(x, y, nx2, ny2):
        # Cast per-pair (no whole-tile f32 copies kept live), accumulate in f32.
        dot = jnp.sum(x.astype(jnp.float32) * y.astype(jnp.float32),
                      axis=-1, keepdims=True)
        # rsqrt on squared norms -> EUP slot; identical to PyTorch's eps clamp.
        c = dot * lax.rsqrt(jnp.maximum(nx2 * ny2, _EPS2))
        c = jnp.where(valid, c, 0.0)               # zero the tail rows
        return jnp.sum(c, keepdims=True)           # (1, 1) per-block partial

    s_va = cos_partial(v, a, nv2, na2)
    s_vt = cos_partial(v, t, nv2, nt2)
    s_at = cos_partial(a, t, na2, nt2)

    # Lane-dense (8, 128) partial-sum block: lanes 0/1/2 carry the three pair
    # sums (replicated over the 8 sublanes); everything else is zero.
    lane = lax.broadcasted_iota(jnp.int32, (8, 128), 1)
    o_ref[...] = (jnp.where(lane == 0, s_va, 0.0)
                  + jnp.where(lane == 1, s_vt, 0.0)
                  + jnp.where(lane == 2, s_at, 0.0))


def _choose_tile_b(batch, feat_dim):
    # Budget for the double-buffered input tiles, counted at 4 B/element
    # regardless of input dtype (f32 upcast temporaries dominate VMEM), over
    # 3 input streams x 2 pipeline buffers.  24 MiB moves ~12 MiB of f32 input
    # per grid step (>= the 4-8 MiB amortization target) while keeping the
    # whole call under a 48 MiB scoped-VMEM limit (fits v7x's 64 MiB VMEM).
    budget = 24 * 1024 * 1024
    tile = max(8, (budget // (6 * feat_dim * 4)) // 8 * 8)
    if batch <= 8:
        return batch                      # single full-batch block
    # Keep >= 2 grid steps so the 'parallel' axis can shard over v7x's 2 TCs.
    half = _ceil_to((batch + 1) // 2, 8)
    return max(8, min(tile, half))
    # TODO(synk): for very large D (>=16-32K) add a trailing 'arbitrary' grid
    # axis over D with small f32 scratch accumulators instead of shrinking
    # tile_b below ~256.


def similarity_kl_cosine(v_f, a_f, t_f, *, tile_b=None):
    """Pallas impl of SimilarityKL(loss_similarity='Cosine', gamma=0.5).forward.

    Accepts arrays of shape (..., D) (cosine over the last dim, mean over the
    rest), any float dtype (bf16 welcome).  Returns a scalar float32 loss.
    """
    assert v_f.shape == a_f.shape == t_f.shape
    feat = v_f.shape[-1]
    v2 = v_f.reshape(-1, feat)
    a2 = a_f.reshape(-1, feat)
    t2 = t_f.reshape(-1, feat)
    batch = v2.shape[0]

    if tile_b is None:
        tile_b = _choose_tile_b(batch, feat)
    elif batch <= 8:
        tile_b = batch
    else:
        tile_b = max(8, (int(tile_b) // 8) * 8)

    num_blocks = pl.cdiv(batch, tile_b)

    in_spec = pl.BlockSpec((tile_b, feat), lambda i: (i, 0))
    out_spec = pl.BlockSpec((8, 128), lambda i: (i, 0))

    itemsize = jnp.dtype(v2.dtype).itemsize
    cost = pl.CostEstimate(
        flops=12 * batch * feat,
        transcendentals=0,
        bytes_accessed=3 * batch * feat * itemsize + num_blocks * 8 * 128 * 4,
    )

    kernel = functools.partial(_similarity_kl_kernel, batch=batch, tile_b=tile_b)

    partials = pl.pallas_call(
        kernel,
        out_shape=jax.ShapeDtypeStruct((num_blocks * 8, 128), jnp.float32),
        grid=(num_blocks,),
        in_specs=[in_spec, in_spec, in_spec],
        out_specs=out_spec,
        compiler_params=pltpu.CompilerParams(
            dimension_semantics=("parallel",),
            vmem_limit_bytes=48 * 1024 * 1024,
        ),
        cost_estimate=cost,
    )(v2, a2, t2)

    # Tiny epilogue: each block wrote its 3 partial sums replicated over 8
    # sublanes -> divide by 8 (exact), then by the true row count, then combine.
    col = jnp.sum(partials, axis=0) * jnp.float32(0.125)   # (128,)
    mean_cos = col[:3] / jnp.float32(batch)                 # [va, vt, at]
    return jnp.mean(1.0 - mean_cos).astype(jnp.float32)


def similarity_kl_forward(inputs, loss_similarity="Cosine", gamma=0.5):
    """Mirrors SimilarityKL.forward for the 'Cosine' path."""
    V_F, A_F, T_F = inputs
    if loss_similarity == "Cosine":
        return similarity_kl_cosine(V_F, A_F, T_F)
    # TODO(synk): 'KL' branch (symmetric F.kl_div, reduction='batchmean') not implemented.
    raise NotImplementedError(loss_similarity)


def _reference(v_f, a_f, t_f):
    # pure-JAX reference for sanity check
    def cos(x, y):
        x = x.astype(jnp.float32)
        y = y.astype(jnp.float32)
        dot = jnp.sum(x * y, axis=-1)
        nx = jnp.linalg.norm(x, axis=-1)
        ny = jnp.linalg.norm(y, axis=-1)
        return dot / jnp.maximum(nx * ny, _EPS)

    l_va = 1.0 - jnp.mean(cos(v_f, a_f))
    l_vt = 1.0 - jnp.mean(cos(v_f, t_f))
    l_at = 1.0 - jnp.mean(cos(a_f, t_f))
    return (l_at + l_va + l_vt) / 3.0


if __name__ == "__main__":
    # Case 1: small aligned batch, single block.
    k1, k2, k3 = jax.random.split(jax.random.PRNGKey(0), 3)
    B, D = 8, 128
    V_F = jax.random.normal(k1, (B, D), dtype=jnp.float32)
    A_F = jax.random.normal(k2, (B, D), dtype=jnp.float32)
    T_F = jax.random.normal(k3, (B, D), dtype=jnp.float32)
    loss = similarity_kl_forward((V_F, A_F, T_F))
    jax.block_until_ready(loss)
    ref = _reference(V_F, A_F, T_F)
    assert jnp.allclose(loss, ref, atol=1e-5, rtol=1e-5), (loss, ref)

    # Case 2: non-multiple-of-8 batch -> exercises the in-kernel tail mask
    # (no jnp.pad HBM round-trip any more).
    k4, k5, k6 = jax.random.split(jax.random.PRNGKey(1), 3)
    B2, D2 = 13, 128
    V2 = jax.random.normal(k4, (B2, D2), dtype=jnp.float32)
    A2 = jax.random.normal(k5, (B2, D2), dtype=jnp.float32)
    T2 = jax.random.normal(k6, (B2, D2), dtype=jnp.float32)
    loss2 = similarity_kl_cosine(V2, A2, T2)
    jax.block_until_ready(loss2)
    ref2 = _reference(V2, A2, T2)
    assert jnp.allclose(loss2, ref2, atol=1e-5, rtol=1e-5), (loss2, ref2)

    # Case 3: forced multi-block grid (pipelining + per-block partial sums).
    k7, k8, k9 = jax.random.split(jax.random.PRNGKey(2), 3)
    B3, D3 = 24, 128
    V3 = jax.random.normal(k7, (B3, D3), dtype=jnp.float32)
    A3 = jax.random.normal(k8, (B3, D3), dtype=jnp.float32)
    T3 = jax.random.normal(k9, (B3, D3), dtype=jnp.float32)
    loss3 = similarity_kl_cosine(V3, A3, T3, tile_b=8)
    jax.block_until_ready(loss3)
    ref3 = _reference(V3, A3, T3)
    assert jnp.allclose(loss3, ref3, atol=1e-5, rtol=1e-5), (loss3, ref3)

    # Case 4: bf16 inputs (halved HBM traffic; per-pair f32 upcast in-kernel).
    V4 = V3.astype(jnp.bfloat16)
    A4 = A3.astype(jnp.bfloat16)
    T4 = T3.astype(jnp.bfloat16)
    loss4 = similarity_kl_cosine(V4, A4, T4)
    jax.block_until_ready(loss4)
    ref4 = _reference(V4, A4, T4)
    assert jnp.allclose(loss4, ref4, atol=1e-4, rtol=1e-4), (loss4, ref4)

    print("KERNEL_OK")
</pallas_src>

<mosaic_0001>
module attributes {stable_mosaic.version = 11 : i64} {
  func.func @_similarity_kl_kernel(%arg0: i32, %arg1: memref<8x128xf32, #tpu.memory_space<vmem>>, %arg2: memref<8x128xf32, #tpu.memory_space<vmem>>, %arg3: memref<8x128xf32, #tpu.memory_space<vmem>>, %arg4: memref<8x128xf32, #tpu.memory_space<vmem>>) attributes {dimension_semantics = [#tpu.dimension_semantics<parallel>], iteration_bounds = array<i64: 1>, scalar_prefetch = 0 : i64, scratch_operands = 0 : i64, tpu.core_type = #tpu.core_type<tc>, window_params = [{transform_indices = @transform_0, window_bounds = array<i64: 8, 128>}, {transform_indices = @transform_1, window_bounds = array<i64: 8, 128>}, {transform_indices = @transform_2, window_bounds = array<i64: 8, 128>}, {transform_indices = @transform_3, window_bounds = array<i64: 8, 128>}]} {
    %0 = tpu.iota {dimensions = array<i32: 0>} : vector<8x1xi32>
    %c8_i32 = arith.constant 8 : i32
    %1 = arith.muli %arg0, %c8_i32 : i32
    %2 = vector.broadcast %1 : i32 to vector<8x1xi32>
    %3 = arith.addi %0, %2 : vector<8x1xi32>
    %c8_i32_0 = arith.constant 8 : i32
    %4 = vector.broadcast %c8_i32_0 : i32 to vector<8x1xi32>
    %5 = arith.cmpi slt, %3, %4 : vector<8x1xi32>
    %c0 = arith.constant 0 : index
    %c0_1 = arith.constant 0 : index
    %6 = vector.load %arg1[%c0, %c0_1] : memref<8x128xf32, #tpu.memory_space<vmem>>, vector<8x128xf32>
    %c0_2 = arith.constant 0 : index
    %c0_3 = arith.constant 0 : index
    %7 = vector.load %arg2[%c0_2, %c0_3] : memref<8x128xf32, #tpu.memory_space<vmem>>, vector<8x128xf32>
    %c0_4 = arith.constant 0 : index
    %c0_5 = arith.constant 0 : index
    %8 = vector.load %arg3[%c0_4, %c0_5] : memref<8x128xf32, #tpu.memory_space<vmem>>, vector<8x128xf32>
    %9 = arith.mulf %6, %6 : vector<8x128xf32>
    %cst = arith.constant dense<0.000000e+00> : vector<8xf32>
    %10 = vector.multi_reduction <add>, %9, %cst [1] : vector<8x128xf32> to vector<8xf32>
    %11 = vector.shape_cast %10 : vector<8xf32> to vector<8x1xf32>
    %12 = arith.mulf %7, %7 : vector<8x128xf32>
    %cst_6 = arith.constant dense<0.000000e+00> : vector<8xf32>
    %13 = vector.multi_reduction <add>, %12, %cst_6 [1] : vector<8x128xf32> to vector<8xf32>
    %14 = vector.shape_cast %13 : vector<8xf32> to vector<8x1xf32>
    %15 = arith.mulf %8, %8 : vector<8x128xf32>
    %cst_7 = arith.constant dense<0.000000e+00> : vector<8xf32>
    %16 = vector.multi_reduction <add>, %15, %cst_7 [1] : vector<8x128xf32> to vector<8xf32>
    %17 = vector.shape_cast %16 : vector<8xf32> to vector<8x1xf32>
    %18 = arith.mulf %6, %7 : vector<8x128xf32>
    %cst_8 = arith.constant dense<0.000000e+00> : vector<8xf32>
    %19 = vector.multi_reduction <add>, %18, %cst_8 [1] : vector<8x128xf32> to vector<8xf32>
    %20 = vector.shape_cast %19 : vector<8xf32> to vector<8x1xf32>
    %21 = arith.mulf %11, %14 : vector<8x1xf32>
    %cst_9 = arith.constant 1.000000e-16 : f32
    %22 = vector.broadcast %cst_9 : f32 to vector<8x1xf32>
    %23 = arith.maximumf %21, %22 : vector<8x1xf32>
    %24 = math.rsqrt %23 : vector<8x1xf32>
    %25 = arith.mulf %20, %24 : vector<8x1xf32>
    %cst_10 = arith.constant 0.000000e+00 : f32
    %26 = vector.broadcast %cst_10 : f32 to vector<8x1xf32>
    %27 = arith.select %5, %25, %26 : vector<8x1xi1>, vector<8x1xf32>
    %28 = vector.shape_cast %27 : vector<8x1xf32> to vector<1x8x1xf32>
    %cst_11 = arith.constant dense<0.000000e+00> : vector<1xf32>
    %29 = vector.multi_reduction <add>, %28, %cst_11 [1, 2] : vector<1x8x1xf32> to vector<1xf32>
    %30 = vector.shape_cast %29 : vector<1xf32> to vector<1x1x1xf32>
    %31 = vector.extract %30[0, 0, 0] : f32 from vector<1x1x1xf32>
    %32 = vector.broadcast %31 : f32 to vector<1x1xf32>
    %33 = arith.mulf %6, %8 : vector<8x128xf32>
    %cst_12 = arith.constant dense<0.000000e+00> : vector<8xf32>
    %34 = vector.multi_reduction <add>, %33, %cst_12 [1] : vector<8x128xf32> to vector<8xf32>
    %35 = vector.shape_cast %34 : vector<8xf32> to vector<8x1xf32>
    %36 = arith.mulf %11, %17 : vector<8x1xf32>
    %cst_13 = arith.constant 1.000000e-16 : f32
    %37 = vector.broadcast %cst_13 : f32 to vector<8x1xf32>
    %38 = arith.maximumf %36, %37 : vector<8x1xf32>
    %39 = math.rsqrt %38 : vector<8x1xf32>
    %40 = arith.mulf %35, %39 : vector<8x1xf32>
    %cst_14 = arith.constant 0.000000e+00 : f32
    %41 = vector.broadcast %cst_14 : f32 to vector<8x1xf32>
    %42 = arith.select %5, %40, %41 : vector<8x1xi1>, vector<8x1xf32>
    %43 = vector.shape_cast %42 : vector<8x1xf32> to vector<1x8x1xf32>
    %cst_15 = arith.constant dense<0.000000e+00> : vector<1xf32>
    %44 = vector.multi_reduction <add>, %43, %cst_15 [1, 2] : vector<1x8x1xf32> to vector<1xf32>
    %45 = vector.shape_cast %44 : vector<1xf32> to vector<1x1x1xf32>
    %46 = vector.extract %45[0, 0, 0] : f32 from vector<1x1x1xf32>
    %47 = vector.broadcast %46 : f32 to vector<1x1xf32>
    %48 = arith.mulf %7, %8 : vector<8x128xf32>
    %cst_16 = arith.constant dense<0.000000e+00> : vector<8xf32>
    %49 = vector.multi_reduction <add>, %48, %cst_16 [1] : vector<8x128xf32> to vector<8xf32>
    %50 = vector.shape_cast %49 : vector<8xf32> to vector<8x1xf32>
    %51 = arith.mulf %14, %17 : vector<8x1xf32>
    %cst_17 = arith.constant 1.000000e-16 : f32
    %52 = vector.broadcast %cst_17 : f32 to vector<8x1xf32>
    %53 = arith.maximumf %51, %52 : vector<8x1xf32>
    %54 = math.rsqrt %53 : vector<8x1xf32>
    %55 = arith.mulf %50, %54 : vector<8x1xf32>
    %cst_18 = arith.constant 0.000000e+00 : f32
    %56 = vector.broadcast %cst_18 : f32 to vector<8x1xf32>
    %57 = arith.select %5, %55, %56 : vector<8x1xi1>, vector<8x1xf32>
    %58 = vector.shape_cast %57 : vector<8x1xf32> to vector<1x8x1xf32>
    %cst_19 = arith.constant dense<0.000000e+00> : vector<1xf32>
    %59 = vector.multi_reduction <add>, %58, %cst_19 [1, 2] : vector<1x8x1xf32> to vector<1xf32>
    %60 = vector.shape_cast %59 : vector<1xf32> to vector<1x1x1xf32>
    %61 = vector.extract %60[0, 0, 0] : f32 from vector<1x1x1xf32>
    %62 = vector.broadcast %61 : f32 to vector<1x1xf32>
    %63 = tpu.iota {dimensions = array<i32: 1>} : vector<8x128xi32>
    %c0_i32 = arith.constant 0 : i32
    %64 = vector.broadcast %c0_i32 : i32 to vector<8x128xi32>
    %65 = arith.cmpi eq, %63, %64 : vector<8x128xi32>
    %cst_20 = arith.constant 0.000000e+00 : f32
    %66 = vector.shape_cast %32 : vector<1x1xf32> to vector<1x1xf32>
    %67 = vector.broadcast %66 : vector<1x1xf32> to vector<8x128xf32>
    %68 = vector.broadcast %cst_20 : f32 to vector<8x128xf32>
    %69 = arith.select %65, %67, %68 : vector<8x128xi1>, vector<8x128xf32>
    %c1_i32 = arith.constant 1 : i32
    %70 = vector.broadcast %c1_i32 : i32 to vector<8x128xi32>
    %71 = arith.cmpi eq, %63, %70 : vector<8x128xi32>
    %cst_21 = arith.constant 0.000000e+00 : f32
    %72 = vector.shape_cast %47 : vector<1x1xf32> to vector<1x1xf32>
    %73 = vector.broadcast %72 : vector<1x1xf32> to vector<8x128xf32>
    %74 = vector.broadcast %cst_21 : f32 to vector<8x128xf32>
    %75 = arith.select %71, %73, %74 : vector<8x128xi1>, vector<8x128xf32>
    %76 = arith.addf %69, %75 : vector<8x128xf32>
    %c2_i32 = arith.constant 2 : i32
    %77 = vector.broadcast %c2_i32 : i32 to vector<8x128xi32>
    %78 = arith.cmpi eq, %63, %77 : vector<8x128xi32>
    %cst_22 = arith.constant 0.000000e+00 : f32
    %79 = vector.shape_cast %62 : vector<1x1xf32> to vector<1x1xf32>
    %80 = vector.broadcast %79 : vector<1x1xf32> to vector<8x128xf32>
    %81 = vector.broadcast %cst_22 : f32 to vector<8x128xf32>
    %82 = arith.select %78, %80, %81 : vector<8x128xi1>, vector<8x128xf32>
    %83 = arith.addf %76, %82 : vector<8x128xf32>
    %c0_23 = arith.constant 0 : index
    %c0_24 = arith.constant 0 : index
    %84 = vector.load %arg4[%c0_23, %c0_24] : memref<8x128xf32, #tpu.memory_space<vmem>>, vector<8x128xf32>
    tpu.vector_store %arg4[%c0_23, %c0_24], %83 {strides = array<i32>} : memref<8x128xf32, #tpu.memory_space<vmem>>, vector<8x128xf32>,
    return
  }
  func.func @transform_0(%arg0: i32) -> (i32, i32) {
    %c0_i32 = arith.constant 0 : i32
    %c0_i32_0 = arith.constant 0 : i32
    return %arg0, %c0_i32 : i32, i32
  }
  func.func @transform_1(%arg0: i32) -> (i32, i32) {
    %c0_i32 = arith.constant 0 : i32
    %c0_i32_0 = arith.constant 0 : i32
    return %arg0, %c0_i32 : i32, i32
  }
  func.func @transform_2(%arg0: i32) -> (i32, i32) {
    %c0_i32 = arith.constant 0 : i32
    %c0_i32_0 = arith.constant 0 : i32
    return %arg0, %c0_i32 : i32, i32
  }
  func.func @transform_3(%arg0: i32) -> (i32, i32) {
    %c0_i32 = arith.constant 0 : i32
    %c0_i32_0 = arith.constant 0 : i32
    return %arg0, %c0_i32 : i32, i32
  }
}

</mosaic_0001>

<llo_original>
// kernel: tpu_custom_call.1
$region0: #{tpu_custom_call.1}
  #allocation0 [shape = 'u32[]', space=smem, size = 0x4, offset = 0x4, fixed_abs, tag = 'smem constant byte address 0x4 - core index']
  #allocation1 [shape = 'u32[144,128]{1,0:T(1,128)}', space=vmem, size = 0x12000, scoped, tag = 'internal scratch']
  %s0 = inlined_call_operand.hbm [shape: f32[8,128], index: 0, kind: input, shape index: {}]
  %s1 = inlined_call_operand.hbm [shape: f32[8,128], index: 1, kind: input, shape index: {}]
  %s2 = inlined_call_operand.hbm [shape: f32[8,128], index: 2, kind: input, shape index: {}]
  %s3 = inlined_call_operand.hbm [shape: f32[8,128], index: 3, kind: output, shape index: {}]
  %s4 = sld [smem:[#allocation0]]
  $region34: #{tpu_custom_call.1} parent=0
    _
  %s6 = ssub.s32 1, %s4
  %s7 = scalar_select 0, %s6, %s4
  $region1: #{tpu_custom_call.1} parent=0
    #allocation2 [shape = 'u8[4096]{0}', space=vmem, size = 0x1000, scoped, tag = 'input window, operand 0, single buffered']
    #allocation3 [shape = 's32[1]{0}', space=sflag, size = 0x4, scoped, tag = 'scoped memory for tpu_custom_call.1']
    #allocation4 [shape = 's32[1]{0}', space=sflag, size = 0x4, scoped, tag = 'scoped memory for tpu_custom_call.1']
    #allocation5 [shape = 'u8[4096]{0}', space=vmem, size = 0x1000, scoped, tag = 'input window, operand 1, single buffered']
    #allocation6 [shape = 's32[1]{0}', space=sflag, size = 0x4, scoped, tag = 'scoped memory for tpu_custom_call.1']
    #allocation7 [shape = 'u8[4096]{0}', space=vmem, size = 0x1000, scoped, tag = 'input window, operand 2, single buffered']
    #allocation8 [shape = 'u8[4096]{0}', space=vmem, size = 0x1000, scoped, tag = 'output window, operand 0, single buffered']
    %8 = vsyncpa [#allocation3], 0
    %9 = vsyncpa [#allocation6], 0
    %10 = vsyncpa [#allocation4], 0
    // Predicated region
    $region2: #{tpu_custom_call.1} parent=1 // pred_check
      _
    $region3: #{tpu_custom_call.1} parent=1 // pred_check_branch
      %12 = sbr.rel (0) target = $region5
    $region4: #{tpu_custom_call.1} parent=1 // pred_region
      %s14 = ssub.s32 128, 128
      %15 = vsyncadd [#allocation3], %s14
      %s17 = sshll.u32 [#allocation2], 4
      %s18 = int_to_ptr.vmem [resolvable:$true] %s17
      %20 = dma.hbm_to_vmem [thread:$0]  %s0, 128, %s18, [#allocation3]
    $region5: #{tpu_custom_call.1} parent=1 // pred_fallthru
      _
    // Predicated region
    $region6: #{tpu_custom_call.1} parent=1 // pred_check
      _
    $region7: #{tpu_custom_call.1} parent=1 // pred_check_branch
      %22 = sbr.rel (0) target = $region9
    $region8: #{tpu_custom_call.1} parent=1 // pred_region
      %s24 = ssub.s32 128, 128
      %25 = vsyncadd [#allocation6], %s24
      %s27 = sshll.u32 [#allocation5], 4
      %s28 = int_to_ptr.vmem [resolvable:$true] %s27
      %30 = dma.hbm_to_vmem [thread:$0]  %s1, 128, %s28, [#allocation6]
    $region9: #{tpu_custom_call.1} parent=1 // pred_fallthru
      _
    // Predicated region
    $region10: #{tpu_custom_call.1} parent=1 // pred_check
      _
    $region11: #{tpu_custom_call.1} parent=1 // pred_check_branch
      %32 = sbr.rel (0) target = $region13
    $region12: #{tpu_custom_call.1} parent=1 // pred_region
      %s34 = ssub.s32 128, 128
      %35 = vsyncadd [#allocation6], %s34
      %s37 = sshll.u32 [#allocation7], 4
      %s38 = int_to_ptr.vmem [resolvable:$true] %s37
      %40 = dma.hbm_to_vmem [thread:$0]  %s2, 128, %s38, [#allocation6]
    $region13: #{tpu_custom_call.1} parent=1 // pred_fallthru
      _
    // Predicated region
    $region14: #{tpu_custom_call.1} parent=1 // pred_check
      _
    $region15: #{tpu_custom_call.1} parent=1 // pred_check_branch
      %42 = sbr.rel (0) target = $region17
    $region16: #{tpu_custom_call.1} parent=1 // pred_region
      %43 = dma.done [#allocation3], 128
    $region17: #{tpu_custom_call.1} parent=1 // pred_fallthru
      _
    // Predicated region
    $region18: #{tpu_custom_call.1} parent=1 // pred_check
      _
    $region19: #{tpu_custom_call.1} parent=1 // pred_check_branch
      %45 = sbr.rel (0) target = $region21
    $region20: #{tpu_custom_call.1} parent=1 // pred_region
      %46 = dma.done [#allocation6], 128
    $region21: #{tpu_custom_call.1} parent=1 // pred_fallthru
      _
    // Predicated region
    $region22: #{tpu_custom_call.1} parent=1 // pred_check
      _
    $region23: #{tpu_custom_call.1} parent=1 // pred_check_branch
      %48 = sbr.rel (0) target = $region25
    $region24: #{tpu_custom_call.1} parent=1 // pred_region
      %49 = dma.done [#allocation6], 128
    $region25: #{tpu_custom_call.1} parent=1 // pred_fallthru
      _
    %v50 = vlaneseq
    %v51 = vshrl.u32 %v50, 7
    %s52 = smul.u32 0, 8
    %v53 = vstv %s52
    %v54 = vadd.s32 %v51, %v53
    %vm55 = vcmp.lt.s32.totalorder %v54, 8
    %v56 = vld [vmem:[#allocation2] sm:$0xff]
    %v57 = vld [vmem:[#allocation5] sm:$0xff]
    %v58 = vld [vmem:[#allocation7] sm:$0xff]
    %v59 = vmul.f32 %v56, %v56
    %60 = vadd.xlane.f32.xlu0 %v59
    %v61 = vpop.xlane.xlu0 %60
    %v62 = vmul.f32 %v57, %v57
    %63 = vadd.xlane.f32.xlu0 %v62
    %v64 = vpop.xlane.xlu0 %63
    %v65 = vmul.f32 %v58, %v58
    %66 = vadd.xlane.f32.xlu0 %v65
    %v67 = vpop.xlane.xlu0 %66
    %v68 = vmul.f32 %v56, %v57
    %69 = vadd.xlane.f32.xlu0 %v68
    %v70 = vpop.xlane.xlu0 %69
    %v71 = vmul.f32 %v61, %v64
    %v72 = vmax.f32 %v71, 1e-16
    %v73 = vrsqrt.pop %v72
    %v74 = vmul.f32 %v70, %v73
    %v75 = vsel %vm55, %v74, 0.0
    %vm76 = vcmask 7168
    %v77 = vsel %vm76, %v75, 0.0
    %78 = vadd.xlane.f32.xlu0 %v77
    %v79 = vpop.xlane.xlu0 %78
    %v80 = vrot.slane %v79, 4
    %v81 = vadd.f32 %v79, %v80
    %v82 = vrot.slane %v81, 2
    %v83 = vadd.f32 %v81, %v82
    %v84 = vrot.slane %v83, 1
    %v85 = vadd.f32 %v83, %v84
    %s86 = vtos %v85
    %v87 = vmul.f32 %v56, %v58
    %88 = vadd.xlane.f32.xlu0 %v87
    %v89 = vpop.xlane.xlu0 %88
    %v90 = vmul.f32 %v61, %v67
    %v91 = vmax.f32 %v90, 1e-16
    %v92 = vrsqrt.pop %v91
    %v93 = vmul.f32 %v89, %v92
    %v94 = vsel %vm55, %v93, 0.0
    %v95 = vsel %vm76, %v94, 0.0
    %96 = vadd.xlane.f32.xlu0 %v95
    %v97 = vpop.xlane.xlu0 %96
    %v98 = vrot.slane %v97, 4
    %v99 = vadd.f32 %v97, %v98
    %v100 = vrot.slane %v99, 2
    %v101 = vadd.f32 %v99, %v100
    %v102 = vrot.slane %v101, 1
    %v103 = vadd.f32 %v101, %v102
    %s104 = vtos %v103
    %v105 = vmul.f32 %v57, %v58
    %106 = vadd.xlane.f32.xlu0 %v105
    %v107 = vpop.xlane.xlu0 %106
    %v108 = vmul.f32 %v64, %v67
    %v109 = vmax.f32 %v108, 1e-16
    %v110 = vrsqrt.pop %v109
    %v111 = vmul.f32 %v107, %v110
    %v112 = vsel %vm55, %v111, 0.0
    %v113 = vsel %vm76, %v112, 0.0
    %114 = vadd.xlane.f32.xlu0 %v113
    %v115 = vpop.xlane.xlu0 %114
    %v116 = vrot.slane %v115, 4
    %v117 = vadd.f32 %v115, %v116
    %v118 = vrot.slane %v117, 2
    %v119 = vadd.f32 %v117, %v118
    %v120 = vrot.slane %v119, 1
    %v121 = vadd.f32 %v119, %v120
    %s122 = vtos %v121
    %v123 = vlaneseq
    %v124 = vand.u32 %v123, 127
    %vm125 = vcmp.eq.s32.totalorder %v124, 0
    %v126 = vstv %s86
    %v127 = vsel %vm125, %v126, 0.0
    %vm128 = vcmp.eq.s32.totalorder %v124, 1
    %v129 = vstv %s104
    %v130 = vsel %vm128, %v129, 0.0
    %v131 = vadd.f32 %v127, %v130
    %vm132 = vcmp.eq.s32.totalorder %v124, 2
    %v133 = vstv %s122
    %v134 = vsel %vm132, %v133, 0.0
    %v135 = vadd.f32 %v131, %v134
    %136 = vst [vmem:[#allocation8] sm:$0xff] %v135
    // Predicated region
    $region26: #{tpu_custom_call.1} parent=1 // pred_check
      _
    $region27: #{tpu_custom_call.1} parent=1 // pred_check_branch
      %138 = sbr.rel (0) target = $region29
    $region28: #{tpu_custom_call.1} parent=1 // pred_region
      %s140 = ssub.s32 128, 128
      %141 = vsyncadd [#allocation4], %s140
      %s143 = sshll.u32 [#allocation8], 4
      %s144 = int_to_ptr.vmem [resolvable:$true] %s143
      %146 = dma.vmem_to_hbm [thread:$0]  %s144, 128, %s3, [#allocation4]
    $region29: #{tpu_custom_call.1} parent=1 // pred_fallthru
      _
    // Predicated region
    $region30: #{tpu_custom_call.1} parent=1 // pred_check
      _
    $region31: #{tpu_custom_call.1} parent=1 // pred_check_branch
      %148 = sbr.rel (0) target = $region33
    $region32: #{tpu_custom_call.1} parent=1 // pred_region
      %149 = dma.done [#allocation4], 128
    $region33: #{tpu_custom_call.1} parent=1 // pred_fallthru
      _
    %150 = vsyncpa [#allocation3], 1
    %151 = vsyncpa [#allocation6], 1
    %152 = vsyncpa [#allocation4], 1

</llo_original>
